<compile_context>
chip_gen: v7x
topology: tpu7x:2x2x1
jax: 0.10.0
libtpu: 0.0.40
codegen_flags: <defaults>
</compile_context>

<pallas_src>
import jax
import jax.numpy as jnp
from jax import lax
from jax.experimental import pallas as pl
from jax.experimental.pallas import tpu as pltpu


def _round_up(x, m):
    return (x + m - 1) // m * m


def _stats_kernel(x_ref, w_ref, sum_ref, sumsq_ref):
    # x_ref     : [2*Cin, TILE_M] bf16, stacked (branch1 rows | branch2 rows)
    # w_ref     : [Cout, 2*Cin]   bf16, block-diagonal fused 1x1-conv weights
    # sum_ref   : [Cout, 1]       f32 per-tile partial sum   (leading tile dim squeezed)
    # sumsq_ref : [Cout, 1]       f32 per-tile partial sumsq
    h = jnp.maximum(x_ref[...], 0)  # relu (commutes with k=1 pooling / zero pad)
    y = jnp.dot(w_ref[...], h, preferred_element_type=jnp.float32)  # [Cout, TILE_M] f32
    sum_ref[...] = jnp.sum(y, axis=1, keepdims=True)
    sumsq_ref[...] = jnp.sum(y * y, axis=1, keepdims=True)


def _apply_kernel(x_ref, w_ref, scale_ref, shift_ref, out_ref):
    # Recompute relu + fused matmul (cheaper than round-tripping pre-BN y via
    # HBM), then apply the folded BatchNorm: out = y * scale + shift.
    h = jnp.maximum(x_ref[...], 0)
    y = jnp.dot(w_ref[...], h, preferred_element_type=jnp.float32)  # [Cout, TILE_M] f32
    out_ref[...] = (y * scale_ref[...] + shift_ref[...]).astype(out_ref.dtype)


def shortcut_forward(x_nchw, w1, w2, gamma, beta, stride, *, eps=1e-5, tile_m=None):
    """x_nchw: [N, Cin, H, W]; w1/w2: [Cout//2, Cin, 1, 1] (PyTorch conv layout)."""
    n, cin, h, w = x_nchw.shape
    cout_half = w1.shape[0]
    cout = 2 * cout_half

    # Branch views (avg_pool k=1 == strided subsample; branch 2 shifted by (1,1)
    # with a zero row/col appended at the bottom/right).
    x1 = x_nchw[:, :, ::stride, ::stride]                               # [N,Cin,Ho,Wo]
    x_shift = jnp.pad(x_nchw[:, :, 1:, 1:], ((0, 0), (0, 0), (0, 1), (0, 1)))
    x2 = x_shift[:, :, ::stride, ::stride]
    ho, wo = x1.shape[2], x1.shape[3]
    m = n * ho * wo

    # Lane-dense layout: channels on sublanes, M on lanes; stack both branches.
    # Activation stream in bf16 (stats / BN fold stay f32).
    x1_cm = jnp.transpose(x1, (1, 0, 2, 3)).reshape(cin, m)
    x2_cm = jnp.transpose(x2, (1, 0, 2, 3)).reshape(cin, m)
    x_stack = jnp.concatenate([x1_cm, x2_cm], axis=0).astype(jnp.bfloat16)  # [2*Cin, M]

    if tile_m is None:
        # Large lane-dense tiles (~2 MiB bf16 per block) to amortize per-step cost.
        tile_m = min(131072, _round_up(m, 128))
    tile_m = _round_up(tile_m, 128)
    m_pad = _round_up(m, tile_m)
    if m_pad != m:
        # Zero columns: relu(0)=0 and W@0=0, so they add nothing to the stats.
        x_stack = jnp.pad(x_stack, ((0, 0), (0, m_pad - m)))

    # Block-diagonal fused weight [Cout, 2*Cin]: [[w1, 0], [0, w2]].
    w1_mat = w1.reshape(cout_half, cin).astype(jnp.float32)
    w2_mat = w2.reshape(cout_half, cin).astype(jnp.float32)
    w_blk = jnp.zeros((cout, 2 * cin), jnp.float32)
    w_blk = w_blk.at[:cout_half, :cin].set(w1_mat)
    w_blk = w_blk.at[cout_half:, cin:].set(w2_mat)
    w_blk = w_blk.astype(jnp.bfloat16)

    num_tiles = m_pad // tile_m
    grid = (num_tiles,)

    # ---- Pass 1: relu + fused 1x1-conv matmul, per-tile partial sum / sumsq ----
    # Per-tile partial outputs (no resident accumulator) keep the grid axis
    # fully 'parallel' so v7x can shard tiles over both TensorCores.
    part_sum, part_sumsq = pl.pallas_call(
        _stats_kernel,
        out_shape=(
            jax.ShapeDtypeStruct((num_tiles, cout, 1), jnp.float32),
            jax.ShapeDtypeStruct((num_tiles, cout, 1), jnp.float32),
        ),
        grid=grid,
        in_specs=[
            pl.BlockSpec((2 * cin, tile_m), lambda i: (0, i)),
            pl.BlockSpec((cout, 2 * cin), lambda i: (0, 0)),
        ],
        out_specs=(
            pl.BlockSpec((None, cout, 1), lambda i: (i, 0, 0)),
            pl.BlockSpec((None, cout, 1), lambda i: (i, 0, 0)),
        ),
        compiler_params=pltpu.CompilerParams(dimension_semantics=("parallel",)),
        cost_estimate=pl.CostEstimate(
            flops=2 * m_pad * (2 * cin) * cout + 3 * cout * m_pad,
            transcendentals=0,
            bytes_accessed=2 * (2 * cin) * m_pad + 2 * cout * 2 * cin
            + 4 * 2 * cout * num_tiles,
        ),
    )(x_stack, w_blk)

    # ---- Fold BN (biased batch stats over the real M) into scale/shift (f32) ----
    ch_sum = jnp.sum(part_sum, axis=0)        # [Cout, 1]
    ch_sumsq = jnp.sum(part_sumsq, axis=0)    # [Cout, 1]
    mean = ch_sum / m
    var = jnp.maximum(ch_sumsq / m - mean * mean, 0.0)   # E[y^2] - E[y]^2, clamped
    scale = gamma.reshape(cout, 1).astype(jnp.float32) * lax.rsqrt(var + eps)
    shift = beta.reshape(cout, 1).astype(jnp.float32) - mean * scale

    # ---- Pass 2: re-read x, recompute relu + matmul, apply folded BN ----
    out_pad = pl.pallas_call(
        _apply_kernel,
        out_shape=jax.ShapeDtypeStruct((cout, m_pad), jnp.bfloat16),
        grid=grid,
        in_specs=[
            pl.BlockSpec((2 * cin, tile_m), lambda i: (0, i)),
            pl.BlockSpec((cout, 2 * cin), lambda i: (0, 0)),
            pl.BlockSpec((cout, 1), lambda i: (0, 0)),
            pl.BlockSpec((cout, 1), lambda i: (0, 0)),
        ],
        out_specs=pl.BlockSpec((cout, tile_m), lambda i: (0, i)),
        compiler_params=pltpu.CompilerParams(dimension_semantics=("parallel",)),
        cost_estimate=pl.CostEstimate(
            flops=2 * m_pad * (2 * cin) * cout + 2 * cout * m_pad,
            transcendentals=0,
            bytes_accessed=2 * (2 * cin + cout) * m_pad + 4 * 4 * cout,
        ),
    )(x_stack, w_blk, scale, shift)

    out_cm = out_pad[:, :m]                                       # drop M padding
    out = out_cm.reshape(cout, n, ho, wo).transpose(1, 0, 2, 3)   # back to NCHW (bf16)
    return out


def _reference_forward(x_nchw, w1, w2, gamma, beta, stride):
    """Pure-JAX f32 reference mirroring the PyTorch forward (training-mode BN)."""
    h = jnp.maximum(x_nchw, 0.0)
    h1 = h[:, :, ::stride, ::stride]
    h1 = jnp.einsum("nchw,oc->nohw", h1, w1.reshape(w1.shape[0], w1.shape[1]))
    h_shift = jnp.pad(h[:, :, 1:, 1:], ((0, 0), (0, 0), (0, 1), (0, 1)))
    h2 = h_shift[:, :, ::stride, ::stride]
    h2 = jnp.einsum("nchw,oc->nohw", h2, w2.reshape(w2.shape[0], w2.shape[1]))
    y = jnp.concatenate([h1, h2], axis=1)
    mean = jnp.mean(y, axis=(0, 2, 3), keepdims=True)
    var = jnp.mean((y - mean) ** 2, axis=(0, 2, 3), keepdims=True)
    y = (y - mean) * lax.rsqrt(var + 1e-5)
    return y * gamma.reshape(1, -1, 1, 1) + beta.reshape(1, -1, 1, 1)


if __name__ == "__main__":
    in_ch, out_ch, stride = 4, 8, 2

    key = jax.random.PRNGKey(0)
    kx, kw1, kw2, kx2 = jax.random.split(key, 4)

    # Conv weights in PyTorch layout [out_ch//2, in_ch, 1, 1]; BN default init.
    w1 = 0.1 * jax.random.normal(kw1, (out_ch // 2, in_ch, 1, 1), dtype=jnp.float32)
    w2 = 0.1 * jax.random.normal(kw2, (out_ch // 2, in_ch, 1, 1), dtype=jnp.float32)
    gamma = jnp.ones((out_ch,), dtype=jnp.float32)
    beta = jnp.zeros((out_ch,), dtype=jnp.float32)

    # Test 1: small shape (single grid step).
    x = jax.random.normal(kx, (2, in_ch, 16, 16), dtype=jnp.float32)
    out = jax.block_until_ready(shortcut_forward(x, w1, w2, gamma, beta, stride))
    ref = _reference_forward(x, w1, w2, gamma, beta, stride)
    assert out.shape == (2, out_ch, 8, 8), out.shape
    err = float(jnp.max(jnp.abs(out.astype(jnp.float32) - ref)))
    assert jnp.allclose(out.astype(jnp.float32), ref, atol=5e-2, rtol=5e-2), err

    # Test 2: force multiple M tiles to exercise cross-tile partial-stat reduction.
    xb = jax.random.normal(kx2, (2, in_ch, 32, 32), dtype=jnp.float32)
    outb = jax.block_until_ready(
        shortcut_forward(xb, w1, w2, gamma, beta, stride, tile_m=128))
    refb = _reference_forward(xb, w1, w2, gamma, beta, stride)
    assert outb.shape == (2, out_ch, 16, 16), outb.shape
    errb = float(jnp.max(jnp.abs(outb.astype(jnp.float32) - refb)))
    assert jnp.allclose(outb.astype(jnp.float32), refb, atol=5e-2, rtol=5e-2), errb

    print("KERNEL_OK")
</pallas_src>

<mosaic_0001>
module attributes {stable_mosaic.version = 11 : i64} {
  func.func @_stats_kernel(%arg0: i32, %arg1: memref<8x128xbf16, #tpu.memory_space<vmem>>, %arg2: memref<8x8xbf16, #tpu.memory_space<vmem>>, %arg3: memref<1x8x1xf32, #tpu.memory_space<vmem>>, %arg4: memref<1x8x1xf32, #tpu.memory_space<vmem>>) attributes {dimension_semantics = [#tpu.dimension_semantics<parallel>], iteration_bounds = array<i64: 1>, scalar_prefetch = 0 : i64, scratch_operands = 0 : i64, tpu.core_type = #tpu.core_type<tc>, window_params = [{transform_indices = @transform_0, window_bounds = array<i64: 8, 128>}, {pipeline_mode = #tpu.pipeline_mode<synchronous>, transform_indices = @transform_1, window_bounds = array<i64: 8, 8>}, {transform_indices = @transform_2, window_bounds = array<i64: 1, 8, 1>}, {transform_indices = @transform_3, window_bounds = array<i64: 1, 8, 1>}]} {
    %c0 = arith.constant 0 : index
    %c0_0 = arith.constant 0 : index
    %0 = vector.load %arg1[%c0, %c0_0] : memref<8x128xbf16, #tpu.memory_space<vmem>>, vector<8x128xbf16>
    %cst = arith.constant 0.000000e+00 : bf16
    %1 = vector.broadcast %cst : bf16 to vector<8x128xbf16>
    %2 = arith.maximumf %0, %1 : vector<8x128xbf16>
    %c0_1 = arith.constant 0 : index
    %c0_2 = arith.constant 0 : index
    %3 = vector.load %arg2[%c0_1, %c0_2] : memref<8x8xbf16, #tpu.memory_space<vmem>>, vector<8x8xbf16>
    %cst_3 = arith.constant dense<0.000000e+00> : vector<8x128xf32>
    %4 = tpu.matmul %3, %2, %cst_3 {dimension_numbers = #tpu.dot_dimension_numbers<[1], [0], [0], [1], [0, 0, 1, 1], [], []>} : vector<8x8xbf16>, vector<8x128xbf16>, vector<8x128xf32> -> vector<8x128xf32>
    %cst_4 = arith.constant dense<0.000000e+00> : vector<8xf32>
    %5 = vector.multi_reduction <add>, %4, %cst_4 [1] : vector<8x128xf32> to vector<8xf32>
    %6 = vector.shape_cast %5 : vector<8xf32> to vector<8x1xf32>
    %c0_5 = arith.constant 0 : index
    %c0_6 = arith.constant 0 : index
    %c0_7 = arith.constant 0 : index
    %7 = vector.load %arg3[%c0_5, %c0_6, %c0_7] : memref<1x8x1xf32, #tpu.memory_space<vmem>>, vector<1x8x1xf32>
    %8 = vector.shape_cast %7 : vector<1x8x1xf32> to vector<8x1xf32>
    %9 = vector.shape_cast %6 : vector<8x1xf32> to vector<1x8x1xf32>
    tpu.vector_store %arg3[%c0_5, %c0_6, %c0_7], %9 {strides = array<i32>} : memref<1x8x1xf32, #tpu.memory_space<vmem>>, vector<1x8x1xf32>,
    %10 = arith.mulf %4, %4 : vector<8x128xf32>
    %cst_8 = arith.constant dense<0.000000e+00> : vector<8xf32>
    %11 = vector.multi_reduction <add>, %10, %cst_8 [1] : vector<8x128xf32> to vector<8xf32>
    %12 = vector.shape_cast %11 : vector<8xf32> to vector<8x1xf32>
    %c0_9 = arith.constant 0 : index
    %c0_10 = arith.constant 0 : index
    %c0_11 = arith.constant 0 : index
    %13 = vector.load %arg4[%c0_9, %c0_10, %c0_11] : memref<1x8x1xf32, #tpu.memory_space<vmem>>, vector<1x8x1xf32>
    %14 = vector.shape_cast %13 : vector<1x8x1xf32> to vector<8x1xf32>
    %15 = vector.shape_cast %12 : vector<8x1xf32> to vector<1x8x1xf32>
    tpu.vector_store %arg4[%c0_9, %c0_10, %c0_11], %15 {strides = array<i32>} : memref<1x8x1xf32, #tpu.memory_space<vmem>>, vector<1x8x1xf32>,
    return
  }
  func.func @transform_0(%arg0: i32) -> (i32, i32) {
    %c0_i32 = arith.constant 0 : i32
    %c0_i32_0 = arith.constant 0 : i32
    return %c0_i32, %arg0 : i32, i32
  }
  func.func @transform_1(%arg0: i32) -> (i32, i32) {
    %c0_i32 = arith.constant 0 : i32
    %c0_i32_0 = arith.constant 0 : i32
    %c0_i32_1 = arith.constant 0 : i32
    return %c0_i32, %c0_i32_0 : i32, i32
  }
  func.func @transform_2(%arg0: i32) -> (i32, i32, i32) {
    %c0_i32 = arith.constant 0 : i32
    %c0_i32_0 = arith.constant 0 : i32
    %c0_i32_1 = arith.constant 0 : i32
    return %arg0, %c0_i32, %c0_i32_0 : i32, i32, i32
  }
  func.func @transform_3(%arg0: i32) -> (i32, i32, i32) {
    %c0_i32 = arith.constant 0 : i32
    %c0_i32_0 = arith.constant 0 : i32
    %c0_i32_1 = arith.constant 0 : i32
    return %arg0, %c0_i32, %c0_i32_0 : i32, i32, i32
  }
}

</mosaic_0001>

<llo_original>
// kernel: tpu_custom_call.1
$region0: #{tpu_custom_call.1}
  #allocation0 [shape = 'u32[]', space=smem, size = 0x4, offset = 0x4, fixed_abs, tag = 'smem constant byte address 0x4 - core index']
  #allocation1 [shape = 'u32[144,128]{1,0:T(1,128)}', space=vmem, size = 0x12000, scoped, tag = 'internal scratch']
  %s0 = inlined_call_operand.hbm [shape: bf16[8,128], index: 0, kind: input, shape index: {}]
  %s1 = inlined_call_operand.hbm [shape: bf16[8,8], index: 1, kind: input, shape index: {}]
  %s2 = inlined_call_operand.vmem [shape: f32[1,8,1], index: 2, kind: output, shape index: {0}]
  %s3 = inlined_call_operand.vmem [shape: f32[1,8,1], index: 3, kind: output, shape index: {1}]
  %4 = xla_tuple %s2, %s3
  %s5 = sld [smem:[#allocation0]]
  $region34: #{tpu_custom_call.1} parent=0
    _
  %s7 = ssub.s32 1, %s5
  %s8 = scalar_select 0, %s7, %s5
  $region1: #{tpu_custom_call.1} parent=0
    #allocation2 [shape = 'u8[2048]{0}', space=vmem, size = 0x800, scoped, tag = 'input window, operand 0, single buffered']
    #allocation3 [shape = 's32[1]{0}', space=sflag, size = 0x4, scoped, tag = 'scoped memory for tpu_custom_call.1']
    #allocation4 [shape = 'u8[2048]{0}', space=vmem, size = 0x800, scoped, tag = 'input window, operand 1, single buffered']
    #allocation5 [shape = 's32[1]{0}', space=sflag, size = 0x4, scoped, tag = 'scoped memory for tpu_custom_call.1']
    %9 = vsyncpa [#allocation3], 0
    %10 = vsyncpa [#allocation5], 0
    // Predicated region
    $region2: #{tpu_custom_call.1} parent=1 // pred_check
      _
    $region3: #{tpu_custom_call.1} parent=1 // pred_check_branch
      %12 = sbr.rel (0) target = $region5
    $region4: #{tpu_custom_call.1} parent=1 // pred_region
      %s14 = ssub.s32 64, 64
      %15 = vsyncadd [#allocation3], %s14
      %s17 = sshll.u32 [#allocation2], 4
      %s18 = int_to_ptr.vmem [resolvable:$true] %s17
      %20 = dma.hbm_to_vmem [thread:$0]  %s0, 64, %s18, [#allocation3]
    $region5: #{tpu_custom_call.1} parent=1 // pred_fallthru
      _
    // Predicated region
    $region6: #{tpu_custom_call.1} parent=1 // pred_check
      _
    $region7: #{tpu_custom_call.1} parent=1 // pred_check_branch
      %22 = sbr.rel (0) target = $region9
    $region8: #{tpu_custom_call.1} parent=1 // pred_region
      %s24 = ssub.s32 64, 64
      %25 = vsyncadd [#allocation5], %s24
      %s27 = sshll.u32 [#allocation4], 4
      %s28 = int_to_ptr.vmem [resolvable:$true] %s27
      %30 = dma.hbm_to_vmem [thread:$0]  %s1, 64, %s28, [#allocation5]
    $region9: #{tpu_custom_call.1} parent=1 // pred_fallthru
      _
    // Predicated region
    $region10: #{tpu_custom_call.1} parent=1 // pred_check
      _
    $region11: #{tpu_custom_call.1} parent=1 // pred_check_branch
      %32 = sbr.rel (0) target = $region13
    $region12: #{tpu_custom_call.1} parent=1 // pred_region
      %33 = dma.done [#allocation3], 64
    $region13: #{tpu_custom_call.1} parent=1 // pred_fallthru
      _
    // Predicated region
    $region14: #{tpu_custom_call.1} parent=1 // pred_check
      _
    $region15: #{tpu_custom_call.1} parent=1 // pred_check_branch
      %35 = sbr.rel (0) target = $region17
    $region16: #{tpu_custom_call.1} parent=1 // pred_region
      %36 = dma.done [#allocation5], 64
    $region17: #{tpu_custom_call.1} parent=1 // pred_fallthru
      _
    %v38 = vld [vmem:[#allocation2] sm:$0xf]
    %v39 = vmax.bf16 %v38, 0
    %v40 = vld [vmem:[#allocation4] sm:$0xf]
    %vm41 = vcmask 64512
    %v43 = vsel %vm41, %v40, 0
    %vm45 = vcmask 1043456
    %v47 = vsel %vm45, %v39, 0
    %49 = vmatprep.subr.bf16.mxu0 0
    %50 = vmatpush1.bf16.msra.mxu0 %v47
    %51 = vmatprep.subr.bf16.mxu0 0
    %52 = vmatpush1.bf16.msra.mxu0 0
    %53 = vmatprep.subr.bf16.mxu0 0
    %54 = vmatpush1.bf16.msra.mxu0 0
    %55 = vmatprep.subr.bf16.mxu0 0
    %56 = vmatpush1.bf16.msra.mxu0 0
    %57 = vmatprep.subr.bf16.mxu0 0
    %58 = vmatpush1.bf16.msra.mxu0 0
    %59 = vmatprep.subr.bf16.mxu0 0
    %60 = vmatpush1.bf16.msra.mxu0 0
    %61 = vmatprep.subr.bf16.mxu0 0
    %62 = vmatpush1.bf16.msra.mxu0 0
    %63 = vmatprep.subr.bf16.mxu0 0
    %64 = vmatpush1.bf16.msra.mxu0 0
    %65 = vmatprep.subr.bf16.mxu0 0
    %66 = vmatpush1.bf16.msra.mxu0 0
    %67 = vmatprep.subr.bf16.mxu0 0
    %68 = vmatpush1.bf16.msra.mxu0 0
    %69 = vmatprep.subr.bf16.mxu0 0
    %70 = vmatpush1.bf16.msra.mxu0 0
    %71 = vmatprep.subr.bf16.mxu0 0
    %72 = vmatpush1.bf16.msra.mxu0 0
    %73 = vmatprep.subr.bf16.mxu0 0
    %74 = vmatpush1.bf16.msra.mxu0 0
    %75 = vmatprep.subr.bf16.mxu0 0
    %76 = vmatpush1.bf16.msra.mxu0 0
    %77 = vmatprep.subr.bf16.mxu0 0
    %78 = vmatpush1.bf16.msra.mxu0 0
    %79 = vmatprep.subr.bf16.mxu0 0
    %80 = vmatpush1.bf16.msra.mxu0 0
    %81 = vmatprep.mubr.bf16.mxu0 0
    %82 = vmatmul.mubr.bf16.gmra.mrb[0].mxu0 %v43
    %v83 = vpop.f32.mrb[0].mxu0
    %v84 = vadd.f32 0.0, %v83
    %v85 = vpop.f32.mrb[0].mxu0
    %v86 = vpop.f32.mrb[0].mxu0
    %v87 = vpop.f32.mrb[0].mxu0
    %88 = vdwg.mxu0
    %89 = vadd.xlane.f32.xlu0 %v84
    %v90 = vpop.xlane.xlu0 %89
    %vm91 = vcmask 7168
    %92 = vst.msk [vmem:[%s2] sm:$0xff] %vm91, %v90
    %v93 = vmul.f32 %v84, %v84
    %94 = vadd.xlane.f32.xlu0 %v93
    %v95 = vpop.xlane.xlu0 %94
    %96 = vst.msk [vmem:[%s3] sm:$0xff] %vm91, %v95
    // Predicated region
    $region18: #{tpu_custom_call.1} parent=1 // pred_check
      _
    $region19: #{tpu_custom_call.1} parent=1 // pred_check_branch
      %98 = sbr.rel (0) target = $region21
    $region20: #{tpu_custom_call.1} parent=1 // pred_region
      _
    $region21: #{tpu_custom_call.1} parent=1 // pred_fallthru
      _
    // Predicated region
    $region22: #{tpu_custom_call.1} parent=1 // pred_check
      _
    $region23: #{tpu_custom_call.1} parent=1 // pred_check_branch
      %100 = sbr.rel (0) target = $region25
    $region24: #{tpu_custom_call.1} parent=1 // pred_region
      _
    $region25: #{tpu_custom_call.1} parent=1 // pred_fallthru
      _
    // Predicated region
    $region26: #{tpu_custom_call.1} parent=1 // pred_check
      _
    $region27: #{tpu_custom_call.1} parent=1 // pred_check_branch
      %102 = sbr.rel (0) target = $region29
    $region28: #{tpu_custom_call.1} parent=1 // pred_region
      _
    $region29: #{tpu_custom_call.1} parent=1 // pred_fallthru
      _
    // Predicated region
    $region30: #{tpu_custom_call.1} parent=1 // pred_check
      _
    $region31: #{tpu_custom_call.1} parent=1 // pred_check_branch
      %104 = sbr.rel (0) target = $region33
    $region32: #{tpu_custom_call.1} parent=1 // pred_region
      _
    $region33: #{tpu_custom_call.1} parent=1 // pred_fallthru
      _
    %105 = vsyncpa [#allocation3], 1
    %106 = vsyncpa [#allocation5], 1

</llo_original>
